<compile_context>
chip_gen: v7x
topology: tpu7x:2x2x1
jax: 0.10.0
libtpu: 0.0.40
codegen_flags: <defaults>
</compile_context>

<pallas_src>
import jax
import jax.numpy as jnp
from jax.experimental import pallas as pl
from jax.experimental.pallas import tpu as pltpu


_VMEM_LIMIT_BYTES = 40 * 1024 * 1024   # <= ~48 MiB so it fits v7x's 64 MiB VMEM
_VMEM_TILE_BUDGET = 28 * 1024 * 1024   # target for the double-buffered working set


def _round_up(v, m):
    return ((v + m - 1) // m) * m


# ----------------------------------------------------------------------------
# Kernels
# ----------------------------------------------------------------------------
def _maxout_kernel_single_k(x_ref, w_ref, b_ref, o_ref):
    """Single-K-tile fast path. grid = (outer, inner) over (B tiles, N tiles).

    x_ref : (tb, Kp)     bf16/compute-dtype input tile (full K)
    w_ref : (L, Kp, tn)  all L weight tiles for this N block (full K)
    b_ref : (L, tn)      f32 biases for this N block
    o_ref : (tb, tn)     f32 output tile (single lane-dense store)
    """
    x = x_ref[...]
    num_l = w_ref.shape[0]          # static
    bias = b_ref[...]               # (L, tn) f32
    # Running max: no L-slab accumulator, no init/finalize phases.
    h = jnp.dot(x, w_ref[0], preferred_element_type=jnp.float32) + bias[0][None, :]
    for l in range(1, num_l):
        z = jnp.dot(x, w_ref[l], preferred_element_type=jnp.float32) + bias[l][None, :]
        h = jnp.maximum(h, z)
    o_ref[...] = h.astype(o_ref.dtype)


def _maxout_kernel_multi_k(x_ref, w_ref, b_ref, o_ref, acc_ref):
    """General path. grid = (B tiles, N tiles, K tiles), K last ("arbitrary").

    x_ref   : (tb, tk)        input tile
    w_ref   : (L, tk, tn)     all L weight tiles for this (k, n) block
    b_ref   : (L, tn)         f32 biases for this n block
    o_ref   : (tb, tn)        output tile (written once, on the last K step)
    acc_ref : (L, tb, tn) f32 scratch, resident across the K axis
    """
    kk = pl.program_id(2)
    nk = pl.num_programs(2)
    num_l = w_ref.shape[0]          # static
    x = x_ref[...]

    @pl.when(kk == 0)
    def _first_step():
        # Write the first partial product directly (no zero-init + "+="),
        # folding the bias in so the finalize is max-only.
        bias = b_ref[...]           # (L, tn) f32
        for l in range(num_l):
            acc_ref[l] = (jnp.dot(x, w_ref[l], preferred_element_type=jnp.float32)
                          + bias[l][None, :])

    @pl.when(kk > 0)
    def _accumulate():
        for l in range(num_l):
            acc_ref[l] += jnp.dot(x, w_ref[l], preferred_element_type=jnp.float32)

    @pl.when(kk == nk - 1)
    def _finalize():
        h = acc_ref[0]
        for l in range(1, num_l):
            h = jnp.maximum(h, acc_ref[l])
        o_ref[...] = h.astype(o_ref.dtype)   # single lane-dense store


# ----------------------------------------------------------------------------
# Tiling
# ----------------------------------------------------------------------------
def _choose_tiles(batch, d_in, n_out, num_l, in_itemsize):
    """Pick (tb, tn, tk) respecting (8,128) tiling and the VMEM budget."""
    bp_min = _round_up(batch, 8)
    np_min = _round_up(n_out, 128)
    kp_min = _round_up(d_in, 128)

    # Big batch tile: amortizes weight streaming across rows.
    tb = min(512, bp_min)

    # N tile: prefer multiples of 256 (full 256-wide v6e/v7x MXU feed).
    if np_min % 512 == 0:
        tn = 512
    elif np_min % 256 == 0:
        tn = 256
    else:
        tn = 128

    # K tile: single K step when the padded reduction fits in <= 1024,
    # otherwise split as evenly as possible into 128-aligned chunks <= 1024.
    if kp_min <= 1024:
        tk = kp_min
    else:
        k_steps = -(-kp_min // 1024)
        tk = _round_up(-(-kp_min // k_steps), 128)

    def footprint(tb_, tn_, tk_):
        multi_k = _round_up(d_in, tk_) > tk_
        fp = 2 * (tb_ * tk_ + num_l * tk_ * tn_) * in_itemsize   # dbl-buffered x, W
        fp += 2 * num_l * tn_ * 4                                # dbl-buffered bias
        fp += 2 * tb_ * tn_ * 4                                  # dbl-buffered out
        if multi_k:
            fp += num_l * tb_ * tn_ * 4                          # resident accumulator
        return fp

    # Shrink until the working set fits the budget (v7x-safe).
    while footprint(tb, tn, tk) > _VMEM_TILE_BUDGET:
        if tn > 128:
            tn //= 2
        elif tb > 8:
            tb = max(8, _round_up(tb // 2, 8))
        elif tk > 128:
            tk = max(128, _round_up(tk // 2, 128))
        else:
            break
    return tb, tn, tk


# ----------------------------------------------------------------------------
# Wrapper
# ----------------------------------------------------------------------------
def make_maxout_fn(w_stack, b_stack, batch, compute_dtype=jnp.bfloat16):
    """Build a maxout forward fn.  Weights are padded + cast ONCE here.

    w_stack : (L, D_in, N) f32  (already transposed vs. torch's (N, D_in))
    b_stack : (L, N)       f32
    batch   : expected batch size (used for tiling; smaller batches also work)
    Returns apply(x) -> (B, N) float32.
    """
    num_l, d_in, n_out = w_stack.shape
    itemsize = jnp.dtype(compute_dtype).itemsize
    tb, tn, tk = _choose_tiles(batch, d_in, n_out, num_l, itemsize)

    bp = _round_up(batch, tb)
    np_ = _round_up(n_out, tn)
    kp = _round_up(d_in, tk)

    # Pre-pad + cast the parameters once (not per forward call).
    w_p = jnp.pad(w_stack, ((0, 0), (0, kp - d_in), (0, np_ - n_out))).astype(compute_dtype)
    b_p = jnp.pad(b_stack, ((0, 0), (0, np_ - n_out))).astype(jnp.float32)

    grid_b, grid_n, grid_k = bp // tb, np_ // tn, kp // tk
    single_k = grid_k == 1

    w_bytes = num_l * kp * np_ * itemsize
    x_bytes = bp * kp * itemsize

    if single_k:
        kernel = _maxout_kernel_single_k
        scratch = []
        dims = ("parallel", "parallel")
        weight_major = (grid_b - 1) * w_bytes > (grid_n - 1) * x_bytes
        if weight_major:
            # Weight-heavy: nj outer / bi inner so each W column-block's block
            # index stays constant across bi -> DMA'd from HBM exactly once.
            grid = (grid_n, grid_b)
            in_specs = [
                pl.BlockSpec((tb, kp), lambda nj, bi: (bi, 0)),
                pl.BlockSpec((num_l, kp, tn), lambda nj, bi: (0, 0, nj)),
                pl.BlockSpec((num_l, tn), lambda nj, bi: (0, nj)),
            ]
            out_specs = pl.BlockSpec((tb, tn), lambda nj, bi: (bi, nj))
            w_passes = 1
        else:
            grid = (grid_b, grid_n)
            in_specs = [
                pl.BlockSpec((tb, kp), lambda bi, nj: (bi, 0)),
                pl.BlockSpec((num_l, kp, tn), lambda bi, nj: (0, 0, nj)),
                pl.BlockSpec((num_l, tn), lambda bi, nj: (0, nj)),
            ]
            out_specs = pl.BlockSpec((tb, tn), lambda bi, nj: (bi, nj))
            w_passes = grid_b
    else:
        kernel = _maxout_kernel_multi_k
        grid = (grid_b, grid_n, grid_k)      # reduction axis last
        in_specs = [
            pl.BlockSpec((tb, tk), lambda bi, nj, kk: (bi, kk)),
            pl.BlockSpec((num_l, tk, tn), lambda bi, nj, kk: (0, kk, nj)),
            pl.BlockSpec((num_l, tn), lambda bi, nj, kk: (0, nj)),
        ]
        out_specs = pl.BlockSpec((tb, tn), lambda bi, nj, kk: (bi, nj))
        scratch = [pltpu.VMEM((num_l, tb, tn), jnp.float32)]
        dims = ("parallel", "parallel", "arbitrary")
        w_passes = grid_b

    cost = pl.CostEstimate(
        flops=2 * bp * kp * np_ * num_l,
        transcendentals=0,
        bytes_accessed=(x_bytes                         # x streamed once
                        + w_passes * w_bytes            # W streamed per B tile (or once)
                        + w_passes * num_l * np_ * 4    # bias
                        + bp * np_ * 4),                # f32 output writeback
    )

    call = pl.pallas_call(
        kernel,
        out_shape=jax.ShapeDtypeStruct((bp, np_), jnp.float32),
        grid_spec=pltpu.PrefetchScalarGridSpec(
            num_scalar_prefetch=0,
            grid=grid,
            in_specs=in_specs,
            out_specs=out_specs,
            scratch_shapes=scratch,
        ),
        compiler_params=pltpu.CompilerParams(
            dimension_semantics=dims,
            vmem_limit_bytes=_VMEM_LIMIT_BYTES,
        ),
        cost_estimate=cost,
    )

    @jax.jit
    def _fwd(x, w_pad, b_pad):
        b_sz = x.shape[0]
        x_p = jnp.pad(x, ((0, bp - b_sz), (0, kp - d_in))).astype(compute_dtype)
        out_p = call(x_p, w_pad, b_pad)
        return out_p[:b_sz, :n_out]

    def apply(x, is_norm=False, **kargs):
        if is_norm:
            # TODO(synk): BatchNorm1d + torch.where norm-constraint clamp branch
            # of the original module is not implemented in the Pallas kernel.
            raise NotImplementedError("is_norm=True path is not implemented")
        if x.shape != (x.shape[0], d_in) or x.shape[0] > bp:
            raise ValueError(f"expected x of shape (<= {bp}, {d_in}), got {x.shape}")
        return _fwd(x, w_p, b_p)

    return apply


# ----------------------------------------------------------------------------
# Params / reference
# ----------------------------------------------------------------------------
def init_params(key, input_size, linear_layers, linear_neurons):
    """Deterministic init mimicking torch.nn.Linear's U(-1/sqrt(fan_in), +)."""
    kw, kb = jax.random.split(key)
    bound = 1.0 / jnp.sqrt(jnp.float32(input_size))
    # Stored already transposed: (L, input_size, linear_neurons)
    w = jax.random.uniform(
        kw, (linear_layers, input_size, linear_neurons),
        minval=-bound, maxval=bound, dtype=jnp.float32)
    b = jax.random.uniform(
        kb, (linear_layers, linear_neurons),
        minval=-bound, maxval=bound, dtype=jnp.float32)
    return w, b


def reference_maxout(x, w_stack, b_stack):
    # Pure-JAX reference: z_l = x @ W_l + b_l ; h = max over l
    z = jnp.einsum("bk,lkn->lbn", x, w_stack) + b_stack[:, None, :]
    return jnp.max(z, axis=0)


def _check(out, x, w_stack, b_stack):
    # Tight check against a reference that uses the same bf16 MXU operands +
    # f32 accumulation as the kernel (only summation order differs).
    ref_bf16 = reference_maxout(
        x.astype(jnp.bfloat16).astype(jnp.float32),
        w_stack.astype(jnp.bfloat16).astype(jnp.float32),
        b_stack)
    assert jnp.allclose(out, ref_bf16, atol=1e-4, rtol=1e-4), "mismatch vs bf16 reference"
    # Loose check against the full-f32 (torch-equivalent) reference.
    ref_f32 = reference_maxout(x, w_stack, b_stack)
    assert jnp.allclose(out, ref_f32, atol=5e-2, rtol=5e-2), "mismatch vs f32 reference"


if __name__ == "__main__":
    # Test 1: module defaults, exercises the single-K fast path.
    batch, input_size, linear_layers, linear_neurons = 8, 32, 3, 64
    key = jax.random.PRNGKey(0)
    kx, kp, kx2, kp2 = jax.random.split(key, 4)

    x = jax.random.normal(kx, (batch, input_size), dtype=jnp.float32)
    w_stack, b_stack = init_params(kp, input_size, linear_layers, linear_neurons)
    fwd = make_maxout_fn(w_stack, b_stack, batch)
    out = jax.block_until_ready(fwd(x))
    assert out.shape == (batch, linear_neurons)
    _check(out, x, w_stack, b_stack)

    # Test 2: larger D_in, exercises the multi-K (accumulator) path.
    batch2, input_size2, linear_layers2, linear_neurons2 = 16, 1500, 2, 200
    x2 = jax.random.normal(kx2, (batch2, input_size2), dtype=jnp.float32)
    w2, b2 = init_params(kp2, input_size2, linear_layers2, linear_neurons2)
    fwd2 = make_maxout_fn(w2, b2, batch2)
    out2 = jax.block_until_ready(fwd2(x2))
    assert out2.shape == (batch2, linear_neurons2)
    _check(out2, x2, w2, b2)

    print("KERNEL_OK")
</pallas_src>

<mosaic_0001>
module attributes {stable_mosaic.version = 11 : i64} {
  func.func @_maxout_kernel_single_k(%arg0: i32, %arg1: i32, %arg2: memref<8x128xbf16, #tpu.memory_space<vmem>>, %arg3: memref<3x128x128xbf16, #tpu.memory_space<vmem>>, %arg4: memref<3x128xf32, #tpu.memory_space<vmem>>, %arg5: memref<8x128xf32, #tpu.memory_space<vmem>>) attributes {dimension_semantics = [#tpu.dimension_semantics<parallel>, #tpu.dimension_semantics<parallel>], iteration_bounds = array<i64: 1, 1>, scalar_prefetch = 0 : i64, scratch_operands = 0 : i64, tpu.core_type = #tpu.core_type<tc>, window_params = [{transform_indices = @transform_0, window_bounds = array<i64: 8, 128>}, {transform_indices = @transform_1, window_bounds = array<i64: 3, 128, 128>}, {transform_indices = @transform_2, window_bounds = array<i64: 3, 128>}, {transform_indices = @transform_3, window_bounds = array<i64: 8, 128>}]} {
    %c0 = arith.constant 0 : index
    %c0_0 = arith.constant 0 : index
    %0 = vector.load %arg2[%c0, %c0_0] : memref<8x128xbf16, #tpu.memory_space<vmem>>, vector<8x128xbf16>
    %c0_1 = arith.constant 0 : index
    %c0_2 = arith.constant 0 : index
    %1 = vector.load %arg4[%c0_1, %c0_2] : memref<3x128xf32, #tpu.memory_space<vmem>>, vector<3x128xf32>
    %c0_3 = arith.constant 0 : index
    %c0_4 = arith.constant 0 : index
    %c0_5 = arith.constant 0 : index
    %2 = vector.load %arg3[%c0_3, %c0_4, %c0_5] : memref<3x128x128xbf16, #tpu.memory_space<vmem>>, vector<1x128x128xbf16>
    %3 = vector.shape_cast %2 : vector<1x128x128xbf16> to vector<128x128xbf16>
    %cst = arith.constant dense<0.000000e+00> : vector<8x128xf32>
    %4 = tpu.matmul %0, %3, %cst {dimension_numbers = #tpu.dot_dimension_numbers<[1], [0], [0], [1], [0, 0, 1, 1], [], []>} : vector<8x128xbf16>, vector<128x128xbf16>, vector<8x128xf32> -> vector<8x128xf32>
    %5 = vector.extract_strided_slice %1 {offsets = [0, 0], sizes = [1, 128], strides = [1, 1]} : vector<3x128xf32> to vector<1x128xf32>
    %6 = vector.shape_cast %5 : vector<1x128xf32> to vector<128xf32>
    %7 = vector.shape_cast %6 : vector<128xf32> to vector<1x128xf32>
    %8 = vector.broadcast %7 : vector<1x128xf32> to vector<8x128xf32>
    %9 = arith.addf %4, %8 : vector<8x128xf32>
    %c1 = arith.constant 1 : index
    %c0_6 = arith.constant 0 : index
    %c0_7 = arith.constant 0 : index
    %10 = vector.load %arg3[%c1, %c0_6, %c0_7] : memref<3x128x128xbf16, #tpu.memory_space<vmem>>, vector<1x128x128xbf16>
    %11 = vector.shape_cast %10 : vector<1x128x128xbf16> to vector<128x128xbf16>
    %cst_8 = arith.constant dense<0.000000e+00> : vector<8x128xf32>
    %12 = tpu.matmul %0, %11, %cst_8 {dimension_numbers = #tpu.dot_dimension_numbers<[1], [0], [0], [1], [0, 0, 1, 1], [], []>} : vector<8x128xbf16>, vector<128x128xbf16>, vector<8x128xf32> -> vector<8x128xf32>
    %13 = vector.extract_strided_slice %1 {offsets = [1, 0], sizes = [1, 128], strides = [1, 1]} : vector<3x128xf32> to vector<1x128xf32>
    %14 = vector.shape_cast %13 : vector<1x128xf32> to vector<128xf32>
    %15 = vector.shape_cast %14 : vector<128xf32> to vector<1x128xf32>
    %16 = vector.broadcast %15 : vector<1x128xf32> to vector<8x128xf32>
    %17 = arith.addf %12, %16 : vector<8x128xf32>
    %18 = arith.maximumf %9, %17 : vector<8x128xf32>
    %c2 = arith.constant 2 : index
    %c0_9 = arith.constant 0 : index
    %c0_10 = arith.constant 0 : index
    %19 = vector.load %arg3[%c2, %c0_9, %c0_10] : memref<3x128x128xbf16, #tpu.memory_space<vmem>>, vector<1x128x128xbf16>
    %20 = vector.shape_cast %19 : vector<1x128x128xbf16> to vector<128x128xbf16>
    %cst_11 = arith.constant dense<0.000000e+00> : vector<8x128xf32>
    %21 = tpu.matmul %0, %20, %cst_11 {dimension_numbers = #tpu.dot_dimension_numbers<[1], [0], [0], [1], [0, 0, 1, 1], [], []>} : vector<8x128xbf16>, vector<128x128xbf16>, vector<8x128xf32> -> vector<8x128xf32>
    %22 = vector.extract_strided_slice %1 {offsets = [2, 0], sizes = [1, 128], strides = [1, 1]} : vector<3x128xf32> to vector<1x128xf32>
    %23 = vector.shape_cast %22 : vector<1x128xf32> to vector<128xf32>
    %24 = vector.shape_cast %23 : vector<128xf32> to vector<1x128xf32>
    %25 = vector.broadcast %24 : vector<1x128xf32> to vector<8x128xf32>
    %26 = arith.addf %21, %25 : vector<8x128xf32>
    %27 = arith.maximumf %18, %26 : vector<8x128xf32>
    %c0_12 = arith.constant 0 : index
    %c0_13 = arith.constant 0 : index
    %28 = vector.load %arg5[%c0_12, %c0_13] : memref<8x128xf32, #tpu.memory_space<vmem>>, vector<8x128xf32>
    tpu.vector_store %arg5[%c0_12, %c0_13], %27 {strides = array<i32>} : memref<8x128xf32, #tpu.memory_space<vmem>>, vector<8x128xf32>,
    return
  }
  func.func @transform_0(%arg0: i32, %arg1: i32) -> (i32, i32) {
    %c0_i32 = arith.constant 0 : i32
    %c0_i32_0 = arith.constant 0 : i32
    return %arg0, %c0_i32 : i32, i32
  }
  func.func @transform_1(%arg0: i32, %arg1: i32) -> (i32, i32, i32) {
    %c0_i32 = arith.constant 0 : i32
    %c0_i32_0 = arith.constant 0 : i32
    %c0_i32_1 = arith.constant 0 : i32
    return %c0_i32, %c0_i32_0, %arg1 : i32, i32, i32
  }
  func.func @transform_2(%arg0: i32, %arg1: i32) -> (i32, i32) {
    %c0_i32 = arith.constant 0 : i32
    %c0_i32_0 = arith.constant 0 : i32
    return %c0_i32, %arg1 : i32, i32
  }
  func.func @transform_3(%arg0: i32, %arg1: i32) -> (i32, i32) {
    %c0_i32 = arith.constant 0 : i32
    return %arg0, %arg1 : i32, i32
  }
}

</mosaic_0001>

<llo_original>
// kernel: _fwd.1
$region0: #{_fwd.1}
  #allocation0 [shape = 'u32[]', space=smem, size = 0x4, offset = 0x4, fixed_abs, tag = 'smem constant byte address 0x4 - core index']
  #allocation1 [shape = 'u32[144,128]{1,0:T(1,128)}', space=vmem, size = 0x12000, scoped, tag = 'internal scratch']
  %s0 = inlined_call_operand.vmem [shape: bf16[8,128], index: 0, kind: input, shape index: {}]
  %s1 = inlined_call_operand.hbm [shape: bf16[3,128,128], index: 1, kind: input, shape index: {}]
  %s2 = inlined_call_operand.vmem [shape: f32[3,128], index: 2, kind: input, shape index: {}]
  %s3 = inlined_call_operand.hbm [shape: f32[8,128], index: 3, kind: output, shape index: {}]
  %s4 = sld [smem:[#allocation0]]
  $region26: #{_fwd.1} parent=0
    _
  %s6 = ssub.s32 1, %s4
  %s7 = scalar_select 0, %s6, %s4
  $region1: #{_fwd.1} parent=0
    #allocation2 [shape = 'u8[98304]{0}', space=vmem, size = 0x18000, scoped, tag = 'input window, operand 1, single buffered']
    #allocation3 [shape = 's32[1]{0}', space=sflag, size = 0x4, scoped, tag = 'scoped memory for _fwd.1']
    #allocation4 [shape = 's32[1]{0}', space=sflag, size = 0x4, scoped, tag = 'scoped memory for _fwd.1']
    #allocation5 [shape = 'u8[4096]{0}', space=vmem, size = 0x1000, scoped, tag = 'output window, operand 0, single buffered']
    %8 = vsyncpa [#allocation3], 0
    %9 = vsyncpa [#allocation4], 0
    // Predicated region
    $region2: #{_fwd.1} parent=1 // pred_check
      _
    $region3: #{_fwd.1} parent=1 // pred_check_branch
      %11 = sbr.rel (0) target = $region5
    $region4: #{_fwd.1} parent=1 // pred_region
      _
    $region5: #{_fwd.1} parent=1 // pred_fallthru
      _
    // Predicated region
    $region6: #{_fwd.1} parent=1 // pred_check
      _
    $region7: #{_fwd.1} parent=1 // pred_check_branch
      %13 = sbr.rel (0) target = $region9
    $region8: #{_fwd.1} parent=1 // pred_region
      %s15 = ssub.s32 3072, 3072
      %16 = vsyncadd [#allocation3], %s15
      %s17 = sshll.u32 [#allocation2], 4
      %s18 = int_to_ptr.vmem [resolvable:$true] %s17
      %23 = dma.hbm_to_vmem [thread:$0]  %s1, 3072, %s18, [#allocation3], 64, 64, 4
    $region9: #{_fwd.1} parent=1 // pred_fallthru
      _
    // Predicated region
    $region10: #{_fwd.1} parent=1 // pred_check
      _
    $region11: #{_fwd.1} parent=1 // pred_check_branch
      %25 = sbr.rel (0) target = $region13
    $region12: #{_fwd.1} parent=1 // pred_region
      _
    $region13: #{_fwd.1} parent=1 // pred_fallthru
      _
    // Predicated region
    $region14: #{_fwd.1} parent=1 // pred_check
      _
    $region15: #{_fwd.1} parent=1 // pred_check_branch
      %27 = sbr.rel (0) target = $region17
    $region16: #{_fwd.1} parent=1 // pred_region
      %28 = dma.done [#allocation3], 3072
    $region17: #{_fwd.1} parent=1 // pred_fallthru
      _
    %v30 = vld [vmem:[%s0] sm:$0xf]
    %v31 = vld [vmem:[%s2] sm:$0x7]
    %v32 = vld [vmem:[#allocation2] sm:$0xf]
    %v33 = vld [vmem:[#allocation2 + $0x4] sm:$0xf]
    %v34 = vld [vmem:[#allocation2 + $0x8] sm:$0xf]
    %v35 = vld [vmem:[#allocation2 + $0xc] sm:$0xf]
    %v36 = vld [vmem:[#allocation2 + $0x10] sm:$0xf]
    %v37 = vld [vmem:[#allocation2 + $0x14] sm:$0xf]
    %v38 = vld [vmem:[#allocation2 + $0x18] sm:$0xf]
    %v39 = vld [vmem:[#allocation2 + $0x1c] sm:$0xf]
    %v40 = vld [vmem:[#allocation2 + $0x20] sm:$0xf]
    %v41 = vld [vmem:[#allocation2 + $0x24] sm:$0xf]
    %v42 = vld [vmem:[#allocation2 + $0x28] sm:$0xf]
    %v43 = vld [vmem:[#allocation2 + $0x2c] sm:$0xf]
    %v44 = vld [vmem:[#allocation2 + $0x30] sm:$0xf]
    %v45 = vld [vmem:[#allocation2 + $0x34] sm:$0xf]
    %v46 = vld [vmem:[#allocation2 + $0x38] sm:$0xf]
    %v47 = vld [vmem:[#allocation2 + $0x3c] sm:$0xf]
    %v48 = vlaneseq
    %v49 = vshrl.u32 %v48, 7
    %v50 = vsub.s32 0, %v49
    %v51 = vrot.slane %v31, %v50
    %v68 = vunpack.c.l.b16 %v32
    %v69 = vunpack.c.l.b16 %v33
    %v70 = vunpack.c.l.b16 %v34
    %v71 = vunpack.c.l.b16 %v35
    %v72 = vunpack.c.l.b16 %v36
    %v73 = vunpack.c.l.b16 %v37
    %v74 = vunpack.c.l.b16 %v38
    %v75 = vunpack.c.l.b16 %v39
    %v76 = vunpack.c.l.b16 %v40
    %v77 = vunpack.c.l.b16 %v41
    %v78 = vunpack.c.l.b16 %v42
    %v79 = vunpack.c.l.b16 %v43
    %v80 = vunpack.c.l.b16 %v44
    %v81 = vunpack.c.l.b16 %v45
    %v82 = vunpack.c.l.b16 %v46
    %v83 = vunpack.c.l.b16 %v47
    %v84 = vpack.c.b16 %v69, %v68
    %v85 = vpack.c.b16 %v71, %v70
    %v86 = vpack.c.b16 %v73, %v72
    %v87 = vpack.c.b16 %v75, %v74
    %v88 = vpack.c.b16 %v77, %v76
    %v89 = vpack.c.b16 %v79, %v78
    %v90 = vpack.c.b16 %v81, %v80
    %v91 = vpack.c.b16 %v83, %v82
    %100 = vmatprep.subr.bf16.mxu0 0
    %101 = vmatpush1.bf16.msra.mxu0 %v84
    %102 = vmatprep.subr.bf16.mxu0 0
    %103 = vmatpush1.bf16.msra.mxu0 %v85
    %104 = vmatprep.subr.bf16.mxu0 0
    %105 = vmatpush1.bf16.msra.mxu0 %v86
    %106 = vmatprep.subr.bf16.mxu0 0
    %107 = vmatpush1.bf16.msra.mxu0 %v87
    %108 = vmatprep.subr.bf16.mxu0 0
    %109 = vmatpush1.bf16.msra.mxu0 %v88
    %110 = vmatprep.subr.bf16.mxu0 0
    %111 = vmatpush1.bf16.msra.mxu0 %v89
    %112 = vmatprep.subr.bf16.mxu0 0
    %113 = vmatpush1.bf16.msra.mxu0 %v90
    %114 = vmatprep.subr.bf16.mxu0 0
    %115 = vmatpush1.bf16.msra.mxu0 %v91
    %116 = vmatprep.subr.bf16.mxu0 0
    %117 = vmatpush1.bf16.msra.mxu0 0
    %118 = vmatprep.subr.bf16.mxu0 0
    %119 = vmatpush1.bf16.msra.mxu0 0
    %120 = vmatprep.subr.bf16.mxu0 0
    %121 = vmatpush1.bf16.msra.mxu0 0
    %122 = vmatprep.subr.bf16.mxu0 0
    %123 = vmatpush1.bf16.msra.mxu0 0
    %124 = vmatprep.subr.bf16.mxu0 0
    %125 = vmatpush1.bf16.msra.mxu0 0
    %126 = vmatprep.subr.bf16.mxu0 0
    %127 = vmatpush1.bf16.msra.mxu0 0
    %128 = vmatprep.subr.bf16.mxu0 0
    %129 = vmatpush1.bf16.msra.mxu0 0
    %130 = vmatprep.subr.bf16.mxu0 0
    %131 = vmatpush1.bf16.msra.mxu0 0
    %132 = vmatprep.mubr.bf16.mxu0 0
    %133 = vmatmul.mubr.bf16.gmra.mrb[0].mxu0 %v30
    %v134 = vpop.f32.mrb[0].mxu0
    %v135 = vadd.f32 %v51, %v134
    %v136 = vpop.f32.mrb[0].mxu0
    %v137 = vpop.f32.mrb[0].mxu0
    %v138 = vpop.f32.mrb[0].mxu0
    %139 = vdwg.mxu0
    %s140 = scalar_lea.vmem [#allocation2], 64
    %v141 = vld [vmem:[%s140] sm:$0xf]
    %v142 = vld [vmem:[%s140 + $0x4] sm:$0xf]
    %v143 = vld [vmem:[%s140 + $0x8] sm:$0xf]
    %v144 = vld [vmem:[%s140 + $0xc] sm:$0xf]
    %v145 = vld [vmem:[%s140 + $0x10] sm:$0xf]
    %v146 = vld [vmem:[%s140 + $0x14] sm:$0xf]
    %v147 = vld [vmem:[%s140 + $0x18] sm:$0xf]
    %v148 = vld [vmem:[%s140 + $0x1c] sm:$0xf]
    %v149 = vld [vmem:[%s140 + $0x20] sm:$0xf]
    %v150 = vld [vmem:[%s140 + $0x24] sm:$0xf]
    %v151 = vld [vmem:[%s140 + $0x28] sm:$0xf]
    %v152 = vld [vmem:[%s140 + $0x2c] sm:$0xf]
    %v153 = vld [vmem:[%s140 + $0x30] sm:$0xf]
    %v154 = vld [vmem:[%s140 + $0x34] sm:$0xf]
    %v155 = vld [vmem:[%s140 + $0x38] sm:$0xf]
    %v156 = vld [vmem:[%s140 + $0x3c] sm:$0xf]
    %v157 = vlaneseq
    %v158 = vshrl.u32 %v157, 7
    %v159 = vsub.s32 1, %v158
    %v160 = vrot.slane %v31, %v159
    %v177 = vunpack.c.l.b16 %v141
    %v178 = vunpack.c.l.b16 %v142
    %v179 = vunpack.c.l.b16 %v143
    %v180 = vunpack.c.l.b16 %v144
    %v181 = vunpack.c.l.b16 %v145
    %v182 = vunpack.c.l.b16 %v146
    %v183 = vunpack.c.l.b16 %v147
    %v184 = vunpack.c.l.b16 %v148
    %v185 = vunpack.c.l.b16 %v149
    %v186 = vunpack.c.l.b16 %v150
    %v187 = vunpack.c.l.b16 %v151
    %v188 = vunpack.c.l.b16 %v152
    %v189 = vunpack.c.l.b16 %v153
    %v190 = vunpack.c.l.b16 %v154
    %v191 = vunpack.c.l.b16 %v155
    %v192 = vunpack.c.l.b16 %v156
    %v193 = vpack.c.b16 %v178, %v177
    %v194 = vpack.c.b16 %v180, %v179
    %v195 = vpack.c.b16 %v182, %v181
    %v196 = vpack.c.b16 %v184, %v183
    %v197 = vpack.c.b16 %v186, %v185
    %v198 = vpack.c.b16 %v188, %v187
    %v199 = vpack.c.b16 %v190, %v189
    %v200 = vpack.c.b16 %v192, %v191
    %209 = vmatprep.subr.bf16.mxu0 0
    %210 = vmatpush1.bf16.msra.mxu0 %v193
    %211 = vmatprep.subr.bf16.mxu0 0
    %212 = vmatpush1.bf16.msra.mxu0 %v194
    %213 = vmatprep.subr.bf16.mxu0 0
    %214 = vmatpush1.bf16.msra.mxu0 %v195
    %215 = vmatprep.subr.bf16.mxu0 0
    %216 = vmatpush1.bf16.msra.mxu0 %v196
    %217 = vmatprep.subr.bf16.mxu0 0
    %218 = vmatpush1.bf16.msra.mxu0 %v197
    %219 = vmatprep.subr.bf16.mxu0 0
    %220 = vmatpush1.bf16.msra.mxu0 %v198
    %221 = vmatprep.subr.bf16.mxu0 0
    %222 = vmatpush1.bf16.msra.mxu0 %v199
    %223 = vmatprep.subr.bf16.mxu0 0
    %224 = vmatpush1.bf16.msra.mxu0 %v200
    %225 = vmatprep.subr.bf16.mxu0 0
    %226 = vmatpush1.bf16.msra.mxu0 0
    %227 = vmatprep.subr.bf16.mxu0 0
    %228 = vmatpush1.bf16.msra.mxu0 0
    %229 = vmatprep.subr.bf16.mxu0 0
    %230 = vmatpush1.bf16.msra.mxu0 0
    %231 = vmatprep.subr.bf16.mxu0 0
    %232 = vmatpush1.bf16.msra.mxu0 0
    %233 = vmatprep.subr.bf16.mxu0 0
    %234 = vmatpush1.bf16.msra.mxu0 0
    %235 = vmatprep.subr.bf16.mxu0 0
    %236 = vmatpush1.bf16.msra.mxu0 0
    %237 = vmatprep.subr.bf16.mxu0 0
    %238 = vmatpush1.bf16.msra.mxu0 0
    %239 = vmatprep.subr.bf16.mxu0 0
    %240 = vmatpush1.bf16.msra.mxu0 0
    %241 = vmatprep.mubr.bf16.mxu0 0
    %242 = vmatmul.mubr.bf16.gmra.mrb[0].mxu0 %v30
    %v243 = vpop.f32.mrb[0].mxu0
    %v244 = vadd.f32 %v160, %v243
    %v245 = vpop.f32.mrb[0].mxu0
    %v246 = vpop.f32.mrb[0].mxu0
    %v247 = vpop.f32.mrb[0].mxu0
    %248 = vdwg.mxu0
    %v249 = vmax.f32 %v135, %v244
    %s250 = scalar_lea.vmem [#allocation2], 128
    %v251 = vld [vmem:[%s250] sm:$0xf]
    %v252 = vld [vmem:[%s250 + $0x4] sm:$0xf]
    %v253 = vld [vmem:[%s250 + $0x8] sm:$0xf]
    %v254 = vld [vmem:[%s250 + $0xc] sm:$0xf]
    %v255 = vld [vmem:[%s250 + $0x10] sm:$0xf]
    %v256 = vld [vmem:[%s250 + $0x14] sm:$0xf]
    %v257 = vld [vmem:[%s250 + $0x18] sm:$0xf]
    %v258 = vld [vmem:[%s250 + $0x1c] sm:$0xf]
    %v259 = vld [vmem:[%s250 + $0x20] sm:$0xf]
    %v260 = vld [vmem:[%s250 + $0x24] sm:$0xf]
    %v261 = vld [vmem:[%s250 + $0x28] sm:$0xf]
    %v262 = vld [vmem:[%s250 + $0x2c] sm:$0xf]
    %v263 = vld [vmem:[%s250 + $0x30] sm:$0xf]
    %v264 = vld [vmem:[%s250 + $0x34] sm:$0xf]
    %v265 = vld [vmem:[%s250 + $0x38] sm:$0xf]
    %v266 = vld [vmem:[%s250 + $0x3c] sm:$0xf]
    %v267 = vlaneseq
    %v268 = vshrl.u32 %v267, 7
    %v269 = vsub.s32 2, %v268
    %v270 = vrot.slane %v31, %v269
    %v287 = vunpack.c.l.b16 %v251
    %v288 = vunpack.c.l.b16 %v252
    %v289 = vunpack.c.l.b16 %v253
    %v290 = vunpack.c.l.b16 %v254
    %v291 = vunpack.c.l.b16 %v255
    %v292 = vunpack.c.l.b16 %v256
    %v293 = vunpack.c.l.b16 %v257
    %v294 = vunpack.c.l.b16 %v258
    %v295 = vunpack.c.l.b16 %v259
    %v296 = vunpack.c.l.b16 %v260
    %v297 = vunpack.c.l.b16 %v261
    %v298 = vunpack.c.l.b16 %v262
    %v299 = vunpack.c.l.b16 %v263
    %v300 = vunpack.c.l.b16 %v264
    %v301 = vunpack.c.l.b16 %v265
    %v302 = vunpack.c.l.b16 %v266
    %v303 = vpack.c.b16 %v288, %v287
    %v304 = vpack.c.b16 %v290, %v289
    %v305 = vpack.c.b16 %v292, %v291
    %v306 = vpack.c.b16 %v294, %v293
    %v307 = vpack.c.b16 %v296, %v295
    %v308 = vpack.c.b16 %v298, %v297
    %v309 = vpack.c.b16 %v300, %v299
    %v310 = vpack.c.b16 %v302, %v301
    %319 = vmatprep.subr.bf16.mxu0 0
    %320 = vmatpush1.bf16.msra.mxu0 %v303
    %321 = vmatprep.subr.bf16.mxu0 0
    %322 = vmatpush1.bf16.msra.mxu0 %v304
    %323 = vmatprep.subr.bf16.mxu0 0
    %324 = vmatpush1.bf16.msra.mxu0 %v305
    %325 = vmatprep.subr.bf16.mxu0 0
    %326 = vmatpush1.bf16.msra.mxu0 %v306
    %327 = vmatprep.subr.bf16.mxu0 0
    %328 = vmatpush1.bf16.msra.mxu0 %v307
    %329 = vmatprep.subr.bf16.mxu0 0
    %330 = vmatpush1.bf16.msra.mxu0 %v308
    %331 = vmatprep.subr.bf16.mxu0 0
    %332 = vmatpush1.bf16.msra.mxu0 %v309
    %333 = vmatprep.subr.bf16.mxu0 0
    %334 = vmatpush1.bf16.msra.mxu0 %v310
    %335 = vmatprep.subr.bf16.mxu0 0
    %336 = vmatpush1.bf16.msra.mxu0 0
    %337 = vmatprep.subr.bf16.mxu0 0
    %338 = vmatpush1.bf16.msra.mxu0 0
    %339 = vmatprep.subr.bf16.mxu0 0
    %340 = vmatpush1.bf16.msra.mxu0 0
    %341 = vmatprep.subr.bf16.mxu0 0
    %342 = vmatpush1.bf16.msra.mxu0 0
    %343 = vmatprep.subr.bf16.mxu0 0
    %344 = vmatpush1.bf16.msra.mxu0 0
    %345 = vmatprep.subr.bf16.mxu0 0
    %346 = vmatpush1.bf16.msra.mxu0 0
    %347 = vmatprep.subr.bf16.mxu0 0
    %348 = vmatpush1.bf16.msra.mxu0 0
    %349 = vmatprep.subr.bf16.mxu0 0
    %350 = vmatpush1.bf16.msra.mxu0 0
    %351 = vmatprep.mubr.bf16.mxu0 0
    %352 = vmatmul.mubr.bf16.gmra.mrb[0].mxu0 %v30
    %v353 = vpop.f32.mrb[0].mxu0
    %v354 = vadd.f32 %v270, %v353
    %v355 = vpop.f32.mrb[0].mxu0
    %v356 = vpop.f32.mrb[0].mxu0
    %v357 = vpop.f32.mrb[0].mxu0
    %358 = vdwg.mxu0
    %v359 = vmax.f32 %v249, %v354
    %360 = vst [vmem:[#allocation5] sm:$0xff] %v359
    // Predicated region
    $region18: #{_fwd.1} parent=1 // pred_check
      _
    $region19: #{_fwd.1} parent=1 // pred_check_branch
      %362 = sbr.rel (0) target = $region21
    $region20: #{_fwd.1} parent=1 // pred_region
      %s364 = ssub.s32 128, 128
      %365 = vsyncadd [#allocation4], %s364
      %s367 = sshll.u32 [#allocation5], 4
      %s368 = int_to_ptr.vmem [resolvable:$true] %s367
      %370 = dma.vmem_to_hbm [thread:$0]  %s368, 128, %s3, [#allocation4]
    $region21: #{_fwd.1} parent=1 // pred_fallthru
      _
    // Predicated region
    $region22: #{_fwd.1} parent=1 // pred_check
      _
    $region23: #{_fwd.1} parent=1 // pred_check_branch
      %372 = sbr.rel (0) target = $region25
    $region24: #{_fwd.1} parent=1 // pred_region
      %373 = dma.done [#allocation4], 128
    $region25: #{_fwd.1} parent=1 // pred_fallthru
      _
    %374 = vsyncpa [#allocation3], 1
    %375 = vsyncpa [#allocation4], 1

</llo_original>
